<compile_context>
chip_gen: v5e
topology: v5e:2x2
jax: 0.10.0
libtpu: 0.0.40
codegen_flags: <defaults>
</compile_context>

<pallas_src>
import math

import jax
import jax.numpy as jnp
from jax.experimental import pallas as pl
from jax.experimental.pallas import tpu as pltpu


def _make_time_encoding_kernel(T, d_obs_time, d_enc, tm, aligned):
    # torch.linspace(0, 1, T)[t] == t / (T - 1); linspace(0, 1, 1) == 0.
    inv_step = (1.0 / (T - 1)) if T > 1 else 0.0
    inv_n = 1.0 / float(d_enc)

    def kernel(obs_ref, w_ref, b_ref, g_ref, beta_ref, o_ref):
        # obs_ref:  [tm, d_obs_time]      calendar-time features
        # w_ref:    [d_obs_time+1, Dp]    linear weight (row 0 = abs-time), zero-padded
        # b_ref/g_ref/beta_ref: [1, Dp]   bias / LN gamma / LN beta, zero-padded
        # o_ref:    [tm, Dp]

        # ---- in-kernel absolute-time feature --------------------------------
        row = jax.lax.broadcasted_iota(jnp.int32, (tm, 1), 0)        # [tm, 1]
        if aligned:
            # tm % T == 0  ->  identical time pattern on every grid step; no
            # program_id arithmetic needed.
            t_idx = row % T
        else:
            t_idx = (pl.program_id(0) * tm + row) % T
        time_abs = t_idx.astype(jnp.float32) * inv_step              # [tm, 1]

        # ---- Linear as unrolled VPU broadcast-FMAs (K = d_obs_time + 1) -----
        w = w_ref[...]                                               # [Din, Dp]
        y = b_ref[...] + time_abs * w[0:1, :]                        # [tm, Dp]
        obs = obs_ref[...].astype(jnp.float32)
        for k in range(d_obs_time):                                  # static unroll
            y = y + obs[:, k:k + 1] * w[k + 1:k + 2, :]

        # ---- LayerNorm over the first d_enc lanes ----------------------------
        # Padded lanes of y are exactly zero (w_p/b_p zero-padded), so the
        # unmasked sums equal the masked sums; one-pass stats keep the two XLU
        # reductions adjacent instead of serializing y -> mean -> centered -> var.
        mean = jnp.sum(y, axis=-1, keepdims=True) * inv_n
        msq = jnp.sum(y * y, axis=-1, keepdims=True) * inv_n
        var = msq - mean * mean
        inv_std = jax.lax.rsqrt(var + 1e-5)                          # PyTorch LN eps
        scale = g_ref[...] * inv_std                                 # fold gamma in
        # Padded gamma/beta are zero -> padded output lanes come out exactly 0.
        o_ref[...] = ((y - mean) * scale + beta_ref[...]).astype(o_ref.dtype)

    return kernel


def time_encoding_forward(obs_history_time, w, b, gamma, beta, *,
                          tm=2048, out_dtype=jnp.float32, return_padded=False):
    """obs_history_time: [B, T, d_obs_time] float32.
    w: [d_obs_time+1, d_time_enc] (transposed vs. PyTorch's (out, in)); row 0
       multiplies the in-kernel absolute-time column, rows 1.. follow obs order.
    b / gamma / beta: [d_time_enc].
    return_padded=True returns the raw [rows_padded, Dp] slab (no slice copy);
    padded rows/lanes are to be ignored by the caller (padded lanes are 0)."""
    B, T, d_obs_time = obs_history_time.shape
    Din, D = w.shape
    assert Din == d_obs_time + 1, "w must be (d_obs_time+1, d_time_enc)"

    # Lane-dense padded output width (multiple of 128).
    Dp = ((D + 127) // 128) * 128
    pad_d = Dp - D
    w_p = jnp.pad(w.astype(jnp.float32), ((0, 0), (0, pad_d)))
    b_p = jnp.pad(b.astype(jnp.float32), (0, pad_d)).reshape(1, Dp)
    g_p = jnp.pad(gamma.astype(jnp.float32), (0, pad_d)).reshape(1, Dp)
    beta_p = jnp.pad(beta.astype(jnp.float32), (0, pad_d)).reshape(1, Dp)

    rows = B * T
    rows8 = ((rows + 7) // 8) * 8

    # ---- row-tile selection with an explicit VMEM budget ---------------------
    # Per-row VMEM: double-buffered obs tile (inflated to 128 lanes by (8,128)
    # tiling), double-buffered output tile, plus ~2 [tm, Dp] f32 LN temporaries.
    obs_lanes = 128 * max(1, -(-d_obs_time // 128))
    bytes_per_row = 4 * (2 * obs_lanes + 2 * Dp + 2 * Dp)
    vmem_budget = 36 << 20                      # headroom under 48 MiB scoped (v7x-safe)
    tm_cap = max(8, (vmem_budget // bytes_per_row) // 8 * 8)

    tm_eff = max(8, (min(tm, tm_cap, rows8) // 8) * 8)

    # Keep grid >= 2 on medium/large inputs so v7x's second TensorCore gets
    # work (near-zero cost on single-TC v5e/v6e).
    if rows8 >= 1024:
        half = (((rows8 + 1) // 2) + 7) // 8 * 8
        tm_eff = min(tm_eff, half)

    # Align the tile to lcm(8, T) when possible so the time column is
    # tile-invariant (program_id drops out of the index math).
    lcm_8T = (8 * T) // math.gcd(8, T)
    if lcm_8T <= tm_eff:
        tm_eff = (tm_eff // lcm_8T) * lcm_8T
    aligned = (tm_eff % T) == 0

    grid = pl.cdiv(rows, tm_eff)
    rows_padded = grid * tm_eff

    obs2d = obs_history_time.reshape(rows, d_obs_time).astype(jnp.float32)
    if rows_padded != rows:
        obs2d = jnp.pad(obs2d, ((0, rows_padded - rows), (0, 0)))

    kernel = _make_time_encoding_kernel(T, d_obs_time, D, tm_eff, aligned)

    out = pl.pallas_call(
        kernel,
        out_shape=jax.ShapeDtypeStruct((rows_padded, Dp), out_dtype),
        grid=(grid,),
        in_specs=[
            pl.BlockSpec((tm_eff, d_obs_time), lambda i: (i, 0)),
            pl.BlockSpec((Din, Dp), lambda i: (0, 0)),
            pl.BlockSpec((1, Dp), lambda i: (0, 0)),
            pl.BlockSpec((1, Dp), lambda i: (0, 0)),
            pl.BlockSpec((1, Dp), lambda i: (0, 0)),
        ],
        out_specs=pl.BlockSpec((tm_eff, Dp), lambda i: (i, 0)),
        compiler_params=pltpu.CompilerParams(
            dimension_semantics=("parallel",),
            vmem_limit_bytes=48 * 1024 * 1024,
        ),
    )(obs2d, w_p, b_p, g_p, beta_p)

    if return_padded:
        return out
    return out[:rows, :D].reshape(B, T, D)


if __name__ == "__main__":
    def _ref(obs, w, b, gamma, beta, T):
        # Pure-JAX reference of the module (torch.linspace + cat + Linear + LayerNorm).
        Bb = obs.shape[0]
        time_abs = jnp.broadcast_to(
            jnp.linspace(0.0, 1.0, T, dtype=jnp.float32)[None, :, None], (Bb, T, 1))
        x = jnp.concatenate([time_abs, obs], axis=-1)
        y = x @ w + b
        mu = y.mean(-1, keepdims=True)
        var = ((y - mu) ** 2).mean(-1, keepdims=True)
        return (y - mu) / jnp.sqrt(var + 1e-5) * gamma + beta

    d_time_enc = 255 // 3  # 85
    key = jax.random.PRNGKey(0)

    # Small shapes consistent with the module: (batch=2, history=16) plus the
    # module's default history length 168 to exercise the aligned time column.
    for (B, T, d_obs_time) in [(2, 16, 2), (3, 168, 2)]:
        key, k_obs, k_w, k_b, k_g, k_beta = jax.random.split(key, 6)
        obs_history_time = jax.random.uniform(k_obs, (B, T, d_obs_time), dtype=jnp.float32)

        Din = d_obs_time + 1
        w = jax.random.normal(k_w, (Din, d_time_enc), dtype=jnp.float32) * 0.1
        b = jax.random.normal(k_b, (d_time_enc,), dtype=jnp.float32) * 0.01
        gamma = 1.0 + 0.05 * jax.random.normal(k_g, (d_time_enc,), dtype=jnp.float32)
        beta = 0.05 * jax.random.normal(k_beta, (d_time_enc,), dtype=jnp.float32)

        out = time_encoding_forward(obs_history_time, w, b, gamma, beta)
        jax.block_until_ready(out)

        ref = _ref(obs_history_time, w, b, gamma, beta, T)
        assert out.shape == (B, T, d_time_enc)
        err = float(jnp.max(jnp.abs(out - ref)))
        assert err < 2e-4, f"mismatch vs reference: {err}"

    print("KERNEL_OK")
</pallas_src>

<mosaic_0001>
module attributes {stable_mosaic.version = 11 : i64} {
  func.func @kernel(%arg0: i32, %arg1: memref<32x2xf32, #tpu.memory_space<vmem>>, %arg2: memref<3x128xf32, #tpu.memory_space<vmem>>, %arg3: memref<1x128xf32, #tpu.memory_space<vmem>>, %arg4: memref<1x128xf32, #tpu.memory_space<vmem>>, %arg5: memref<1x128xf32, #tpu.memory_space<vmem>>, %arg6: memref<32x128xf32, #tpu.memory_space<vmem>>) attributes {dimension_semantics = [#tpu.dimension_semantics<parallel>], iteration_bounds = array<i64: 1>, scalar_prefetch = 0 : i64, scratch_operands = 0 : i64, tpu.core_type = #tpu.core_type<tc>, window_params = [{transform_indices = @transform_0, window_bounds = array<i64: 32, 2>}, {pipeline_mode = #tpu.pipeline_mode<synchronous>, transform_indices = @transform_1, window_bounds = array<i64: 3, 128>}, {pipeline_mode = #tpu.pipeline_mode<synchronous>, transform_indices = @transform_2, window_bounds = array<i64: 1, 128>}, {pipeline_mode = #tpu.pipeline_mode<synchronous>, transform_indices = @transform_3, window_bounds = array<i64: 1, 128>}, {pipeline_mode = #tpu.pipeline_mode<synchronous>, transform_indices = @transform_4, window_bounds = array<i64: 1, 128>}, {transform_indices = @transform_5, window_bounds = array<i64: 32, 128>}]} {
    %0 = tpu.iota {dimensions = array<i32: 0>} : vector<32x1xi32>
    %c16_i32 = arith.constant 16 : i32
    %c0_i32 = arith.constant 0 : i32
    %1 = arith.cmpi eq, %c16_i32, %c0_i32 : i32
    %c1_i32 = arith.constant 1 : i32
    %2 = arith.select %1, %c1_i32, %c16_i32 : i32
    %3 = vector.broadcast %2 : i32 to vector<32x1xi32>
    %4 = arith.remsi %0, %3 : vector<32x1xi32>
    %c0_i32_0 = arith.constant 0 : i32
    %5 = vector.broadcast %c0_i32_0 : i32 to vector<32x1xi32>
    %6 = arith.cmpi ne, %4, %5 : vector<32x1xi32>
    %c0_i32_1 = arith.constant 0 : i32
    %7 = vector.broadcast %c0_i32_1 : i32 to vector<32x1xi32>
    %8 = arith.cmpi slt, %4, %7 : vector<32x1xi32>
    %c0_i32_2 = arith.constant 0 : i32
    %9 = arith.cmpi slt, %2, %c0_i32_2 : i32
    %10 = vector.broadcast %9 : i1 to vector<32x1xi1>
    %11 = vector.broadcast %10 : vector<32x1xi1> to vector<32x1xi1>
    %12 = arith.xori %8, %11 : vector<32x1xi1>
    %13 = arith.andi %12, %6 : vector<32x1xi1>
    %14 = vector.broadcast %2 : i32 to vector<32x1xi32>
    %15 = arith.addi %4, %14 : vector<32x1xi32>
    %16 = arith.select %13, %15, %4 : vector<32x1xi1>, vector<32x1xi32>
    %17 = arith.sitofp %16 : vector<32x1xi32> to vector<32x1xf32>
    %cst = arith.constant 0.0666666701 : f32
    %18 = vector.broadcast %cst : f32 to vector<32x1xf32>
    %19 = arith.mulf %17, %18 : vector<32x1xf32>
    %c0 = arith.constant 0 : index
    %c0_3 = arith.constant 0 : index
    %20 = vector.load %arg2[%c0, %c0_3] : memref<3x128xf32, #tpu.memory_space<vmem>>, vector<3x128xf32>
    %c0_4 = arith.constant 0 : index
    %c0_5 = arith.constant 0 : index
    %21 = vector.load %arg3[%c0_4, %c0_5] : memref<1x128xf32, #tpu.memory_space<vmem>>, vector<1x128xf32>
    %22 = vector.extract_strided_slice %20 {offsets = [0, 0], sizes = [1, 128], strides = [1, 1]} : vector<3x128xf32> to vector<1x128xf32>
    %23 = vector.broadcast %19 : vector<32x1xf32> to vector<32x128xf32>
    %24 = vector.broadcast %22 : vector<1x128xf32> to vector<32x128xf32>
    %25 = arith.mulf %23, %24 : vector<32x128xf32>
    %26 = vector.broadcast %21 : vector<1x128xf32> to vector<32x128xf32>
    %27 = arith.addf %26, %25 : vector<32x128xf32>
    %c0_6 = arith.constant 0 : index
    %c0_7 = arith.constant 0 : index
    %28 = vector.load %arg1[%c0_6, %c0_7] : memref<32x2xf32, #tpu.memory_space<vmem>>, vector<32x2xf32>
    %29 = vector.extract_strided_slice %28 {offsets = [0, 0], sizes = [32, 1], strides = [1, 1]} : vector<32x2xf32> to vector<32x1xf32>
    %30 = vector.extract_strided_slice %20 {offsets = [1, 0], sizes = [1, 128], strides = [1, 1]} : vector<3x128xf32> to vector<1x128xf32>
    %31 = vector.broadcast %29 : vector<32x1xf32> to vector<32x128xf32>
    %32 = vector.broadcast %30 : vector<1x128xf32> to vector<32x128xf32>
    %33 = arith.mulf %31, %32 : vector<32x128xf32>
    %34 = arith.addf %27, %33 : vector<32x128xf32>
    %35 = vector.extract_strided_slice %28 {offsets = [0, 1], sizes = [32, 1], strides = [1, 1]} : vector<32x2xf32> to vector<32x1xf32>
    %36 = vector.extract_strided_slice %20 {offsets = [2, 0], sizes = [1, 128], strides = [1, 1]} : vector<3x128xf32> to vector<1x128xf32>
    %37 = vector.broadcast %35 : vector<32x1xf32> to vector<32x128xf32>
    %38 = vector.broadcast %36 : vector<1x128xf32> to vector<32x128xf32>
    %39 = arith.mulf %37, %38 : vector<32x128xf32>
    %40 = arith.addf %34, %39 : vector<32x128xf32>
    %cst_8 = arith.constant dense<0.000000e+00> : vector<32xf32>
    %41 = vector.multi_reduction <add>, %40, %cst_8 [1] : vector<32x128xf32> to vector<32xf32>
    %42 = vector.shape_cast %41 : vector<32xf32> to vector<32x1xf32>
    %cst_9 = arith.constant 0.0117647061 : f32
    %43 = vector.broadcast %cst_9 : f32 to vector<32x1xf32>
    %44 = arith.mulf %42, %43 : vector<32x1xf32>
    %45 = arith.mulf %40, %40 : vector<32x128xf32>
    %cst_10 = arith.constant dense<0.000000e+00> : vector<32xf32>
    %46 = vector.multi_reduction <add>, %45, %cst_10 [1] : vector<32x128xf32> to vector<32xf32>
    %47 = vector.shape_cast %46 : vector<32xf32> to vector<32x1xf32>
    %cst_11 = arith.constant 0.0117647061 : f32
    %48 = vector.broadcast %cst_11 : f32 to vector<32x1xf32>
    %49 = arith.mulf %47, %48 : vector<32x1xf32>
    %50 = arith.mulf %44, %44 : vector<32x1xf32>
    %51 = arith.subf %49, %50 : vector<32x1xf32>
    %cst_12 = arith.constant 9.99999974E-6 : f32
    %52 = vector.broadcast %cst_12 : f32 to vector<32x1xf32>
    %53 = arith.addf %51, %52 : vector<32x1xf32>
    %54 = math.rsqrt %53 : vector<32x1xf32>
    %c0_13 = arith.constant 0 : index
    %c0_14 = arith.constant 0 : index
    %55 = vector.load %arg4[%c0_13, %c0_14] : memref<1x128xf32, #tpu.memory_space<vmem>>, vector<1x128xf32>
    %56 = vector.broadcast %55 : vector<1x128xf32> to vector<32x128xf32>
    %57 = vector.broadcast %54 : vector<32x1xf32> to vector<32x128xf32>
    %58 = arith.mulf %56, %57 : vector<32x128xf32>
    %59 = vector.broadcast %44 : vector<32x1xf32> to vector<32x128xf32>
    %60 = arith.subf %40, %59 : vector<32x128xf32>
    %61 = arith.mulf %60, %58 : vector<32x128xf32>
    %c0_15 = arith.constant 0 : index
    %c0_16 = arith.constant 0 : index
    %62 = vector.load %arg5[%c0_15, %c0_16] : memref<1x128xf32, #tpu.memory_space<vmem>>, vector<1x128xf32>
    %63 = vector.broadcast %62 : vector<1x128xf32> to vector<32x128xf32>
    %64 = arith.addf %61, %63 : vector<32x128xf32>
    %c0_17 = arith.constant 0 : index
    %c0_18 = arith.constant 0 : index
    %65 = vector.load %arg6[%c0_17, %c0_18] : memref<32x128xf32, #tpu.memory_space<vmem>>, vector<32x128xf32>
    tpu.vector_store %arg6[%c0_17, %c0_18], %64 {strides = array<i32>} : memref<32x128xf32, #tpu.memory_space<vmem>>, vector<32x128xf32>,
    return
  }
  func.func @transform_0(%arg0: i32) -> (i32, i32) {
    %c0_i32 = arith.constant 0 : i32
    %c0_i32_0 = arith.constant 0 : i32
    return %arg0, %c0_i32 : i32, i32
  }
  func.func @transform_1(%arg0: i32) -> (i32, i32) {
    %c0_i32 = arith.constant 0 : i32
    %c0_i32_0 = arith.constant 0 : i32
    %c0_i32_1 = arith.constant 0 : i32
    return %c0_i32, %c0_i32_0 : i32, i32
  }
  func.func @transform_2(%arg0: i32) -> (i32, i32) {
    %c0_i32 = arith.constant 0 : i32
    %c0_i32_0 = arith.constant 0 : i32
    %c0_i32_1 = arith.constant 0 : i32
    return %c0_i32, %c0_i32_0 : i32, i32
  }
  func.func @transform_3(%arg0: i32) -> (i32, i32) {
    %c0_i32 = arith.constant 0 : i32
    %c0_i32_0 = arith.constant 0 : i32
    %c0_i32_1 = arith.constant 0 : i32
    return %c0_i32, %c0_i32_0 : i32, i32
  }
  func.func @transform_4(%arg0: i32) -> (i32, i32) {
    %c0_i32 = arith.constant 0 : i32
    %c0_i32_0 = arith.constant 0 : i32
    %c0_i32_1 = arith.constant 0 : i32
    return %c0_i32, %c0_i32_0 : i32, i32
  }
  func.func @transform_5(%arg0: i32) -> (i32, i32) {
    %c0_i32 = arith.constant 0 : i32
    %c0_i32_0 = arith.constant 0 : i32
    return %arg0, %c0_i32 : i32, i32
  }
}

</mosaic_0001>

<llo_original>
// kernel: tpu_custom_call.1
$region0: #{tpu_custom_call.1}
  #allocation0 [shape = 'u32[]', space=smem, size = 0x4, offset = 0x4, fixed_abs, tag = 'smem constant byte address 0x4 - core index']
  #allocation1 [shape = 'u32[72,128]{1,0:T(1,128)}', space=vmem, size = 0x9000, scoped, tag = 'internal scratch']
  %s0 = inlined_call_operand.vmem [shape: f32[32,2], index: 0, kind: input, shape index: {}]
  %s1 = inlined_call_operand.vmem [shape: f32[3,128], index: 1, kind: input, shape index: {}]
  %s2 = inlined_call_operand.vmem [shape: f32[1,128], index: 2, kind: input, shape index: {}]
  %s3 = inlined_call_operand.vmem [shape: f32[1,128], index: 3, kind: input, shape index: {}]
  %s4 = inlined_call_operand.vmem [shape: f32[1,128], index: 4, kind: input, shape index: {}]
  %s5 = inlined_call_operand.hbm [shape: f32[32,128], index: 5, kind: output, shape index: {}]
  %s6 = sld [smem:[#allocation0]]
  $region30: #{tpu_custom_call.1} parent=0
    _
  %s8 = ssub.s32 1, %s6
  %s9 = scalar_select 0, %s8, %s6
  $region1: #{tpu_custom_call.1} parent=0
    #allocation2 [shape = 'u8[16384]{0}', space=vmem, size = 0x4000, scoped, tag = 'output window, operand 0, single buffered']
    #allocation3 [shape = 's32[1]{0}', space=sflag, size = 0x4, scoped, tag = 'scoped memory for tpu_custom_call.1']
    %10 = vsyncpa [#allocation3], 0
    // Predicated region
    $region2: #{tpu_custom_call.1} parent=1 // pred_check
      _
    $region3: #{tpu_custom_call.1} parent=1 // pred_check_branch
      %12 = sbr.rel (0) target = $region5
    $region4: #{tpu_custom_call.1} parent=1 // pred_region
      _
    $region5: #{tpu_custom_call.1} parent=1 // pred_fallthru
      _
    // Predicated region
    $region6: #{tpu_custom_call.1} parent=1 // pred_check
      _
    $region7: #{tpu_custom_call.1} parent=1 // pred_check_branch
      %14 = sbr.rel (0) target = $region9
    $region8: #{tpu_custom_call.1} parent=1 // pred_region
      _
    $region9: #{tpu_custom_call.1} parent=1 // pred_fallthru
      _
    // Predicated region
    $region10: #{tpu_custom_call.1} parent=1 // pred_check
      _
    $region11: #{tpu_custom_call.1} parent=1 // pred_check_branch
      %16 = sbr.rel (0) target = $region13
    $region12: #{tpu_custom_call.1} parent=1 // pred_region
      _
    $region13: #{tpu_custom_call.1} parent=1 // pred_fallthru
      _
    // Predicated region
    $region14: #{tpu_custom_call.1} parent=1 // pred_check
      _
    $region15: #{tpu_custom_call.1} parent=1 // pred_check_branch
      %18 = sbr.rel (0) target = $region17
    $region16: #{tpu_custom_call.1} parent=1 // pred_region
      _
    $region17: #{tpu_custom_call.1} parent=1 // pred_fallthru
      _
    // Predicated region
    $region18: #{tpu_custom_call.1} parent=1 // pred_check
      _
    $region19: #{tpu_custom_call.1} parent=1 // pred_check_branch
      %20 = sbr.rel (0) target = $region21
    $region20: #{tpu_custom_call.1} parent=1 // pred_region
      _
    $region21: #{tpu_custom_call.1} parent=1 // pred_fallthru
      _
    %v21 = vlaneseq
    %v22 = vshrl.u32 %v21, 7
    %v23 = vadd.s32 %v22, 8
    %v24 = vadd.s32 %v22, 16
    %v25 = vadd.s32 %v22, 24
    %vm26 = vcmp.lt.s32.totalorder %v22, 0
    %v27 = vsub.s32 0, %v22
    %v28 = vsel %vm26, %v27, %v22
    %v29 = vshrl.u32 %v28, 4
    %v30 = vand.u32 %v28, 15
    %v31 = vsub.s32 0, %v30
    %v32 = vsel %vm26, %v31, %v30
    %vm33 = vcmp.lt.s32.totalorder %v23, 0
    %v34 = vsub.s32 0, %v23
    %v35 = vsel %vm33, %v34, %v23
    %v36 = vshrl.u32 %v35, 4
    %v37 = vand.u32 %v35, 15
    %v38 = vsub.s32 0, %v37
    %v39 = vsel %vm33, %v38, %v37
    %vm40 = vcmp.lt.s32.totalorder %v24, 0
    %v41 = vsub.s32 0, %v24
    %v42 = vsel %vm40, %v41, %v24
    %v43 = vshrl.u32 %v42, 4
    %v44 = vand.u32 %v42, 15
    %v45 = vsub.s32 0, %v44
    %v46 = vsel %vm40, %v45, %v44
    %vm47 = vcmp.lt.s32.totalorder %v25, 0
    %v48 = vsub.s32 0, %v25
    %v49 = vsel %vm47, %v48, %v25
    %v50 = vshrl.u32 %v49, 4
    %v51 = vand.u32 %v49, 15
    %v52 = vsub.s32 0, %v51
    %v53 = vsel %vm47, %v52, %v51
    %vm54 = vcmp.ne.s32.totalorder %v32, 0
    %vm55 = vcmp.ne.s32.totalorder %v39, 0
    %vm56 = vcmp.ne.s32.totalorder %v46, 0
    %vm57 = vcmp.ne.s32.totalorder %v53, 0
    %vm58 = vcmp.lt.s32.totalorder %v32, 0
    %vm59 = vcmp.lt.s32.totalorder %v39, 0
    %vm60 = vcmp.lt.s32.totalorder %v46, 0
    %vm61 = vcmp.lt.s32.totalorder %v53, 0
    %vm62 = vmand %vm58, %vm54
    %vm63 = vmand %vm59, %vm55
    %vm64 = vmand %vm60, %vm56
    %vm65 = vmand %vm61, %vm57
    %v66 = vadd.s32 %v32, 16
    %v67 = vadd.s32 %v39, 16
    %v68 = vadd.s32 %v46, 16
    %v69 = vadd.s32 %v53, 16
    %v70 = vsel %vm62, %v66, %v32
    %v71 = vsel %vm63, %v67, %v39
    %v72 = vsel %vm64, %v68, %v46
    %v73 = vsel %vm65, %v69, %v53
    %v74 = vcvt.s32.f32 %v70
    %v75 = vcvt.s32.f32 %v71
    %v76 = vcvt.s32.f32 %v72
    %v77 = vcvt.s32.f32 %v73
    %v78 = vmul.f32 %v74, 0.06666667
    %v79 = vmul.f32 %v75, 0.06666667
    %v80 = vmul.f32 %v76, 0.06666667
    %v81 = vmul.f32 %v77, 0.06666667
    %v82 = vld [vmem:[%s1] sm:$0x7]
    %v83 = vld [vmem:[%s2] sm:$0x1]
    %v84 = vperm.slane %v82, 0
    %v85 = vmul.f32 %v78, %v84
    %v86 = vmul.f32 %v79, %v84
    %v87 = vmul.f32 %v80, %v84
    %v88 = vmul.f32 %v81, %v84
    %v90 = vperm.slane %v83, 0
    %v92 = vadd.f32 %v90, %v85
    %v93 = vadd.f32 %v90, %v86
    %v94 = vadd.f32 %v90, %v87
    %v95 = vadd.f32 %v90, %v88
    %v96 = vld [vmem:[%s0] sm:$0xff]
    %v97 = vld [vmem:[%s0 + $0x8] sm:$0xff]
    %v98 = vld [vmem:[%s0 + $0x10] sm:$0xff]
    %v99 = vld [vmem:[%s0 + $0x18] sm:$0xff]
    %101 = vset.pattern.permute.xlu0 0
    %102 = vperm.xlu0 %101, %v96
    %v103 = vpop.permute.xlu0 %102
    %106 = vset.pattern.permute.xlu0 0
    %107 = vperm.xlu0 %106, %v97
    %v108 = vpop.permute.xlu0 %107
    %111 = vset.pattern.permute.xlu0 0
    %112 = vperm.xlu0 %111, %v98
    %v113 = vpop.permute.xlu0 %112
    %116 = vset.pattern.permute.xlu0 0
    %117 = vperm.xlu0 %116, %v99
    %v118 = vpop.permute.xlu0 %117
    %v120 = vperm.slane %v82, 1
    %v121 = vmul.f32 %v103, %v120
    %v122 = vmul.f32 %v108, %v120
    %v123 = vmul.f32 %v113, %v120
    %v124 = vmul.f32 %v118, %v120
    %v125 = vadd.f32 %v92, %v121
    %v126 = vadd.f32 %v93, %v122
    %v127 = vadd.f32 %v94, %v123
    %v128 = vadd.f32 %v95, %v124
    %129 = vset.pattern.permute.xlu0 1
    %130 = vperm.xlu0 %129, %v96
    %v131 = vpop.permute.xlu0 %130
    %133 = vset.pattern.permute.xlu0 1
    %134 = vperm.xlu0 %133, %v97
    %v135 = vpop.permute.xlu0 %134
    %137 = vset.pattern.permute.xlu0 1
    %138 = vperm.xlu0 %137, %v98
    %v139 = vpop.permute.xlu0 %138
    %141 = vset.pattern.permute.xlu0 1
    %142 = vperm.xlu0 %141, %v99
    %v143 = vpop.permute.xlu0 %142
    %v145 = vperm.slane %v82, 2
    %v146 = vmul.f32 %v131, %v145
    %v147 = vmul.f32 %v135, %v145
    %v148 = vmul.f32 %v139, %v145
    %v149 = vmul.f32 %v143, %v145
    %v150 = vadd.f32 %v125, %v146
    %v151 = vadd.f32 %v126, %v147
    %v152 = vadd.f32 %v127, %v148
    %v153 = vadd.f32 %v128, %v149
    %154 = vadd.xlane.f32.xlu0 %v150
    %v155 = vpop.xlane.xlu0 %154
    %156 = vadd.xlane.f32.xlu0 %v151
    %v157 = vpop.xlane.xlu0 %156
    %158 = vadd.xlane.f32.xlu0 %v152
    %v159 = vpop.xlane.xlu0 %158
    %160 = vadd.xlane.f32.xlu0 %v153
    %v161 = vpop.xlane.xlu0 %160
    %v162 = vmul.f32 %v155, 0.011764706
    %v163 = vmul.f32 %v157, 0.011764706
    %v164 = vmul.f32 %v159, 0.011764706
    %v165 = vmul.f32 %v161, 0.011764706
    %v166 = vmul.f32 %v150, %v150
    %v167 = vmul.f32 %v151, %v151
    %v168 = vmul.f32 %v152, %v152
    %v169 = vmul.f32 %v153, %v153
    %170 = vadd.xlane.f32.xlu0 %v166
    %v171 = vpop.xlane.xlu0 %170
    %172 = vadd.xlane.f32.xlu0 %v167
    %v173 = vpop.xlane.xlu0 %172
    %174 = vadd.xlane.f32.xlu0 %v168
    %v175 = vpop.xlane.xlu0 %174
    %176 = vadd.xlane.f32.xlu0 %v169
    %v177 = vpop.xlane.xlu0 %176
    %v178 = vmul.f32 %v171, 0.011764706
    %v179 = vmul.f32 %v173, 0.011764706
    %v180 = vmul.f32 %v175, 0.011764706
    %v181 = vmul.f32 %v177, 0.011764706
    %v182 = vmul.f32 %v162, %v162
    %v183 = vmul.f32 %v163, %v163
    %v184 = vmul.f32 %v164, %v164
    %v185 = vmul.f32 %v165, %v165
    %v186 = vsub.f32 %v178, %v182
    %v187 = vsub.f32 %v179, %v183
    %v188 = vsub.f32 %v180, %v184
    %v189 = vsub.f32 %v181, %v185
    %v190 = vadd.f32 %v186, 1e-05
    %v191 = vadd.f32 %v187, 1e-05
    %v192 = vadd.f32 %v188, 1e-05
    %v193 = vadd.f32 %v189, 1e-05
    %v194 = vrsqrt.pop %v190
    %v195 = vmul.f32 %v194, %v190
    %v196 = vmul.f32 %v195, %v194
    %v197 = vmul.f32 0.5, %v196
    %v198 = vsub.f32 1.5, %v197
    %v199 = vmul.f32 %v194, %v198
    %vm200 = vweird.f32 %v190
    %vm201 = vweird.f32 %v194
    %vm202 = vmor %vm200, %vm201
    %v203 = vsel %vm202, %v194, %v199
    %v204 = vrsqrt.pop %v191
    %v205 = vmul.f32 %v204, %v191
    %v206 = vmul.f32 %v205, %v204
    %v207 = vmul.f32 0.5, %v206
    %v208 = vsub.f32 1.5, %v207
    %v209 = vmul.f32 %v204, %v208
    %vm210 = vweird.f32 %v191
    %vm211 = vweird.f32 %v204
    %vm212 = vmor %vm210, %vm211
    %v213 = vsel %vm212, %v204, %v209
    %v214 = vrsqrt.pop %v192
    %v215 = vmul.f32 %v214, %v192
    %v216 = vmul.f32 %v215, %v214
    %v217 = vmul.f32 0.5, %v216
    %v218 = vsub.f32 1.5, %v217
    %v219 = vmul.f32 %v214, %v218
    %vm220 = vweird.f32 %v192
    %vm221 = vweird.f32 %v214
    %vm222 = vmor %vm220, %vm221
    %v223 = vsel %vm222, %v214, %v219
    %v224 = vrsqrt.pop %v193
    %v225 = vmul.f32 %v224, %v193
    %v226 = vmul.f32 %v225, %v224
    %v227 = vmul.f32 0.5, %v226
    %v228 = vsub.f32 1.5, %v227
    %v229 = vmul.f32 %v224, %v228
    %vm230 = vweird.f32 %v193
    %vm231 = vweird.f32 %v224
    %vm232 = vmor %vm230, %vm231
    %v233 = vsel %vm232, %v224, %v229
    %v234 = vld [vmem:[%s3] sm:$0x1]
    %v236 = vperm.slane %v234, 0
    %v238 = vmul.f32 %v236, %v203
    %v239 = vmul.f32 %v236, %v213
    %v240 = vmul.f32 %v236, %v223
    %v241 = vmul.f32 %v236, %v233
    %v242 = vsub.f32 %v150, %v162
    %v243 = vsub.f32 %v151, %v163
    %v244 = vsub.f32 %v152, %v164
    %v245 = vsub.f32 %v153, %v165
    %v246 = vmul.f32 %v242, %v238
    %v247 = vmul.f32 %v243, %v239
    %v248 = vmul.f32 %v244, %v240
    %v249 = vmul.f32 %v245, %v241
    %v250 = vld [vmem:[%s4] sm:$0x1]
    %v252 = vperm.slane %v250, 0
    %v254 = vadd.f32 %v246, %v252
    %v255 = vadd.f32 %v247, %v252
    %v256 = vadd.f32 %v248, %v252
    %v257 = vadd.f32 %v249, %v252
    %258 = vst [vmem:[#allocation2] sm:$0xff] %v254
    %259 = vst [vmem:[#allocation2 + $0x8] sm:$0xff] %v255
    %260 = vst [vmem:[#allocation2 + $0x10] sm:$0xff] %v256
    %261 = vst [vmem:[#allocation2 + $0x18] sm:$0xff] %v257
    // Predicated region
    $region22: #{tpu_custom_call.1} parent=1 // pred_check
      _
    $region23: #{tpu_custom_call.1} parent=1 // pred_check_branch
      %263 = sbr.rel (0) target = $region25
    $region24: #{tpu_custom_call.1} parent=1 // pred_region
      %265 = vsyncadd [#allocation3], 0
      %s266 = sshll.u32 [#allocation2], 4
      %s267 = int_to_ptr.vmem [resolvable:$true] %s266
      %s268 = sshll.u32 %s5, 4
      %s269 = int_to_ptr.hbm [resolvable:$true] %s268
      %274 = dma.vmem_to_hbm [thread:$0]  %s267, 512, %s269, [#allocation3], 128, 128, 8
    $region25: #{tpu_custom_call.1} parent=1 // pred_fallthru
      _
    // Predicated region
    $region26: #{tpu_custom_call.1} parent=1 // pred_check
      _
    $region27: #{tpu_custom_call.1} parent=1 // pred_check_branch
      %276 = sbr.rel (0) target = $region29
    $region28: #{tpu_custom_call.1} parent=1 // pred_region
      %278 = dma.done [#allocation3], 512
    $region29: #{tpu_custom_call.1} parent=1 // pred_fallthru
      _
    %279 = vsyncpa [#allocation3], 1

</llo_original>
